<compile_context>
chip_gen: v7x
topology: tpu7x:2x2x1
jax: 0.10.0
libtpu: 0.0.40
codegen_flags: <defaults>
</compile_context>

<pallas_src>
import jax
import jax.numpy as jnp
from jax.experimental import pallas as pl
from jax.experimental.pallas import tpu as pltpu

INPUT_DIM = 100
HIDDEN_DIM = 128
OUTPUT_DIM = 1


def _round_up(n, m):
    return ((n + m - 1) // m) * m


def _discriminator_kernel(x_ref, w1_ref, b1_ref, w2_ref, b2_ref, o_ref):
    # layer1: Linear(input_dim -> hidden) + ReLU.
    # Cast x to bf16 in VMEM (cheap VPU op, hidden under the x DMA) so the
    # MXU takes the bf16 fast path with f32 accumulation.
    x = x_ref[...].astype(jnp.bfloat16)
    h = jnp.dot(x, w1_ref[...], preferred_element_type=jnp.float32)
    h = jnp.maximum(h + b1_ref[...], 0.0)                      # (tm, H) f32, VPU
    # layer2: Linear(hidden -> 1).  N == 1, so a VPU multiply + lane reduction
    # (XLU) instead of a 1-output-column MXU matmul.
    logits = jnp.sum(h * w2_ref[...], axis=-1) + b2_ref[0]     # (tm,) f32
    # sigmoid; exp goes to the EUP slot (idle here).  The divide is off the
    # critical path (mem-bound kernel), so keep the exact spelling.
    probs = 1.0 / (1.0 + jnp.exp(-logits))
    # lane-dense store: batch lives on the lane axis of the output block.
    o_ref[...] = probs.reshape(o_ref.shape)


def discriminator_forward(x, w1, b1, w2, b2, *, block_rows=2048):
    """x: (B, input_dim) f32/bf16.  Returns (B, 1) f32 in [0, 1].

    w1: (input_dim, hidden)  (transpose of torch layer1.weight)
    b1: (hidden,) or (1, hidden)
    w2: (hidden, 1)          (transpose of torch layer2.weight)
    b2: (1,) or (1, 1)
    """
    B, D = x.shape
    H = w1.shape[1]

    # Row tile: multiple of 8 sublanes, capped at block_rows.
    tm = min(block_rows, _round_up(B, 8))
    grid = pl.cdiv(B, tm)
    b_pad = grid * tm

    # Pad the batch only when needed; no wrapper-side dtype conversions of x.
    x_in = x if b_pad == B else jnp.pad(x, ((0, b_pad - B), (0, 0)))
    w1_bf16 = w1.astype(jnp.bfloat16)
    b1_row = b1.reshape(1, H).astype(jnp.float32)
    w2_row = w2.reshape(1, H).astype(jnp.float32)   # (H,1) -> (1,H) row
    b2_s = b2.reshape(-1).astype(jnp.float32)       # (1,) scalar for SMEM

    x_bytes = b_pad * D * jnp.dtype(x_in.dtype).itemsize

    out = pl.pallas_call(
        _discriminator_kernel,
        out_shape=jax.ShapeDtypeStruct((grid, 1, tm), jnp.float32),
        grid=(grid,),
        in_specs=[
            pl.BlockSpec((tm, D), lambda i: (i, 0)),   # x: streamed row tiles
            pl.BlockSpec((D, H), lambda i: (0, 0)),    # W1: resident in VMEM
            pl.BlockSpec((1, H), lambda i: (0, 0)),    # b1: resident in VMEM
            pl.BlockSpec((1, H), lambda i: (0, 0)),    # W2 row: resident
            pl.BlockSpec(memory_space=pltpu.SMEM),     # b2: SMEM scalar
        ],
        out_specs=pl.BlockSpec((1, 1, tm), lambda i: (i, 0, 0)),
        compiler_params=pltpu.CompilerParams(
            dimension_semantics=("parallel",),
        ),
        cost_estimate=pl.CostEstimate(
            flops=2 * b_pad * D * H + 3 * b_pad * H,
            transcendentals=b_pad,
            bytes_accessed=x_bytes + D * H * 2 + 2 * H * 4 + 4 + b_pad * 4,
        ),
    )(x_in, w1_bf16, b1_row, w2_row, b2_s)

    # (grid, 1, tm) lane-dense slab -> (B, 1) column.
    return out.reshape(-1)[:B].reshape(B, OUTPUT_DIM)


def init_params(key, input_dim=INPUT_DIM, hidden_dim=HIDDEN_DIM,
                output_dim=OUTPUT_DIM):
    """Deterministic synthetic params, stored already transposed: (in, out)."""
    k1, k2, k3, k4 = jax.random.split(key, 4)
    s1 = 1.0 / jnp.sqrt(input_dim)
    s2 = 1.0 / jnp.sqrt(hidden_dim)
    w1 = jax.random.uniform(k1, (input_dim, hidden_dim), jnp.float32, -s1, s1)
    b1 = jax.random.uniform(k2, (1, hidden_dim), jnp.float32, -s1, s1)
    w2 = jax.random.uniform(k3, (hidden_dim, output_dim), jnp.float32, -s2, s2)
    b2 = jax.random.uniform(k4, (1, output_dim), jnp.float32, -s2, s2)
    return w1, b1, w2, b2


def _reference(x, w1, b1, w2, b2):
    """Plain-JAX reference with the same bf16 rounding applied to x and W1."""
    xb = x.astype(jnp.bfloat16).astype(jnp.float32)
    w1b = w1.astype(jnp.bfloat16).astype(jnp.float32)
    h = jnp.maximum(
        jnp.dot(xb, w1b, precision=jax.lax.Precision.HIGHEST)
        + b1.reshape(1, -1), 0.0)
    logits = jnp.sum(h * w2.reshape(1, -1), axis=-1, keepdims=True) \
        + b2.reshape(1, -1)
    return jax.nn.sigmoid(logits)


if __name__ == "__main__":
    key = jax.random.PRNGKey(0)
    kx, kp = jax.random.split(key)
    w1, b1, w2, b2 = init_params(kp)

    # Small case consistent with the module: batch=2, single tile.
    x_small = jax.random.normal(kx, (2, INPUT_DIM), jnp.float32)
    out_small = jax.block_until_ready(
        discriminator_forward(x_small, w1, b1, w2, b2))
    ref_small = _reference(x_small, w1, b1, w2, b2)
    assert out_small.shape == (2, OUTPUT_DIM)
    assert jnp.allclose(out_small, ref_small, atol=1e-3, rtol=1e-3)

    # Multi-tile case with a padded final tile: batch=300, tm=128 -> grid=3.
    x_big = jax.random.normal(jax.random.fold_in(kx, 1), (300, INPUT_DIM),
                              jnp.float32)
    out_big = jax.block_until_ready(
        discriminator_forward(x_big, w1, b1, w2, b2, block_rows=128))
    ref_big = _reference(x_big, w1, b1, w2, b2)
    assert out_big.shape == (300, OUTPUT_DIM)
    assert jnp.allclose(out_big, ref_big, atol=1e-3, rtol=1e-3)

    # bf16-input path (x already narrow upstream): streams half the bytes.
    x_bf = x_big.astype(jnp.bfloat16)
    out_bf = jax.block_until_ready(
        discriminator_forward(x_bf, w1, b1, w2, b2, block_rows=128))
    ref_bf = _reference(x_bf, w1, b1, w2, b2)
    assert jnp.allclose(out_bf, ref_bf, atol=1e-3, rtol=1e-3)

    print("KERNEL_OK")
</pallas_src>

<mosaic_0001>
module attributes {stable_mosaic.version = 11 : i64} {
  func.func @_discriminator_kernel(%arg0: i32, %arg1: memref<8x100xf32, #tpu.memory_space<vmem>>, %arg2: memref<100x128xbf16, #tpu.memory_space<vmem>>, %arg3: memref<1x128xf32, #tpu.memory_space<vmem>>, %arg4: memref<1x128xf32, #tpu.memory_space<vmem>>, %arg5: memref<1xf32, #tpu.memory_space<smem>>, %arg6: memref<1x1x8xf32, #tpu.memory_space<vmem>>) attributes {dimension_semantics = [#tpu.dimension_semantics<parallel>], iteration_bounds = array<i64: 1>, scalar_prefetch = 0 : i64, scratch_operands = 0 : i64, tpu.core_type = #tpu.core_type<tc>, window_params = [{transform_indices = @transform_0, window_bounds = array<i64: 8, 100>}, {pipeline_mode = #tpu.pipeline_mode<synchronous>, transform_indices = @transform_1, window_bounds = array<i64: 100, 128>}, {pipeline_mode = #tpu.pipeline_mode<synchronous>, transform_indices = @transform_2, window_bounds = array<i64: 1, 128>}, {pipeline_mode = #tpu.pipeline_mode<synchronous>, transform_indices = @transform_3, window_bounds = array<i64: 1, 128>}, {transform_indices = @transform_4, window_bounds = array<i64: 1>}, {transform_indices = @transform_5, window_bounds = array<i64: 1, 1, 8>}]} {
    %c0 = arith.constant 0 : index
    %c0_0 = arith.constant 0 : index
    %0 = vector.load %arg1[%c0, %c0_0] : memref<8x100xf32, #tpu.memory_space<vmem>>, vector<8x100xf32>
    %1 = arith.truncf %0 : vector<8x100xf32> to vector<8x100xbf16>
    %c0_1 = arith.constant 0 : index
    %c0_2 = arith.constant 0 : index
    %2 = vector.load %arg2[%c0_1, %c0_2] : memref<100x128xbf16, #tpu.memory_space<vmem>>, vector<100x128xbf16>
    %cst = arith.constant dense<0.000000e+00> : vector<8x128xf32>
    %3 = tpu.matmul %1, %2, %cst {dimension_numbers = #tpu.dot_dimension_numbers<[1], [0], [0], [1], [0, 0, 1, 1], [], []>} : vector<8x100xbf16>, vector<100x128xbf16>, vector<8x128xf32> -> vector<8x128xf32>
    %c0_3 = arith.constant 0 : index
    %c0_4 = arith.constant 0 : index
    %4 = vector.load %arg3[%c0_3, %c0_4] : memref<1x128xf32, #tpu.memory_space<vmem>>, vector<1x128xf32>
    %5 = vector.broadcast %4 : vector<1x128xf32> to vector<8x128xf32>
    %6 = arith.addf %3, %5 : vector<8x128xf32>
    %cst_5 = arith.constant 0.000000e+00 : f32
    %7 = vector.broadcast %cst_5 : f32 to vector<8x128xf32>
    %8 = arith.maximumf %6, %7 : vector<8x128xf32>
    %c0_6 = arith.constant 0 : index
    %c0_7 = arith.constant 0 : index
    %9 = vector.load %arg4[%c0_6, %c0_7] : memref<1x128xf32, #tpu.memory_space<vmem>>, vector<1x128xf32>
    %10 = vector.broadcast %9 : vector<1x128xf32> to vector<8x128xf32>
    %11 = arith.mulf %8, %10 : vector<8x128xf32>
    %cst_8 = arith.constant dense<0.000000e+00> : vector<8xf32>
    %12 = vector.multi_reduction <add>, %11, %cst_8 [1] : vector<8x128xf32> to vector<8xf32>
    %c0_9 = arith.constant 0 : index
    %13 = memref.load %arg5[%c0_9] : memref<1xf32, #tpu.memory_space<smem>>
    %14 = vector.broadcast %13 : f32 to vector<8xf32>
    %15 = arith.addf %12, %14 : vector<8xf32>
    %cst_10 = arith.constant 0.000000e+00 : f32
    %16 = vector.broadcast %cst_10 : f32 to vector<8xf32>
    %17 = arith.subf %16, %15 : vector<8xf32>
    %18 = math.exp %17 : vector<8xf32>
    %cst_11 = arith.constant 1.000000e+00 : f32
    %19 = vector.broadcast %cst_11 : f32 to vector<8xf32>
    %20 = arith.addf %19, %18 : vector<8xf32>
    %cst_12 = arith.constant 1.000000e+00 : f32
    %21 = vector.broadcast %cst_12 : f32 to vector<8xf32>
    %22 = arith.divf %21, %20 : vector<8xf32>
    %23 = vector.shape_cast %22 : vector<8xf32> to vector<1x1x8xf32>
    %c0_13 = arith.constant 0 : index
    %c0_14 = arith.constant 0 : index
    %c0_15 = arith.constant 0 : index
    %24 = vector.load %arg6[%c0_13, %c0_14, %c0_15] : memref<1x1x8xf32, #tpu.memory_space<vmem>>, vector<1x1x8xf32>
    tpu.vector_store %arg6[%c0_13, %c0_14, %c0_15], %23 {strides = array<i32>} : memref<1x1x8xf32, #tpu.memory_space<vmem>>, vector<1x1x8xf32>,
    return
  }
  func.func @transform_0(%arg0: i32) -> (i32, i32) {
    %c0_i32 = arith.constant 0 : i32
    %c0_i32_0 = arith.constant 0 : i32
    return %arg0, %c0_i32 : i32, i32
  }
  func.func @transform_1(%arg0: i32) -> (i32, i32) {
    %c0_i32 = arith.constant 0 : i32
    %c0_i32_0 = arith.constant 0 : i32
    %c0_i32_1 = arith.constant 0 : i32
    return %c0_i32, %c0_i32_0 : i32, i32
  }
  func.func @transform_2(%arg0: i32) -> (i32, i32) {
    %c0_i32 = arith.constant 0 : i32
    %c0_i32_0 = arith.constant 0 : i32
    %c0_i32_1 = arith.constant 0 : i32
    return %c0_i32, %c0_i32_0 : i32, i32
  }
  func.func @transform_3(%arg0: i32) -> (i32, i32) {
    %c0_i32 = arith.constant 0 : i32
    %c0_i32_0 = arith.constant 0 : i32
    %c0_i32_1 = arith.constant 0 : i32
    return %c0_i32, %c0_i32_0 : i32, i32
  }
  func.func @transform_4(%arg0: i32) -> i32 {
    %c0_i32 = arith.constant 0 : i32
    %c0_i32_0 = arith.constant 0 : i32
    return %c0_i32 : i32
  }
  func.func @transform_5(%arg0: i32) -> (i32, i32, i32) {
    %c0_i32 = arith.constant 0 : i32
    %c0_i32_0 = arith.constant 0 : i32
    %c0_i32_1 = arith.constant 0 : i32
    return %arg0, %c0_i32, %c0_i32_0 : i32, i32, i32
  }
}

</mosaic_0001>

<llo_original>
// kernel: tpu_custom_call.1
$region0: #{tpu_custom_call.1}
  #allocation0 [shape = 'u32[]', space=smem, size = 0x4, offset = 0x4, fixed_abs, tag = 'smem constant byte address 0x4 - core index']
  #allocation1 [shape = 'u32[144,128]{1,0:T(1,128)}', space=vmem, size = 0x12000, scoped, tag = 'internal scratch']
  #allocation2 [shape = 'f32[1]{0:T(128)S(6)}', space=smem, size = 0x200, scoped, tag = 'scoped memory for tpu_custom_call.1']
  %s0 = inlined_call_operand.hbm [shape: f32[8,100], index: 0, kind: input, shape index: {}]
  %s1 = inlined_call_operand.hbm [shape: bf16[100,128], index: 1, kind: input, shape index: {}]
  %s2 = inlined_call_operand.vmem [shape: f32[1,128], index: 2, kind: input, shape index: {}]
  %s3 = inlined_call_operand.vmem [shape: f32[1,128], index: 3, kind: input, shape index: {}]
  %s4 = inlined_call_operand.<no memory space> [shape: f32[1], index: 4, kind: input, shape index: {}]
  %s5 = inlined_call_operand.hbm [shape: f32[1,1,8], index: 5, kind: output, shape index: {}]
  %s6 = sld [smem:[#allocation0]]
  $region38: #{tpu_custom_call.1} parent=0
    _
  %s8 = ssub.s32 1, %s6
  %s9 = scalar_select 0, %s8, %s6
  %10 = sst [smem:[#allocation2]] %s4
  $region1: #{tpu_custom_call.1} parent=0
    #allocation3 [shape = 'u8[4096]{0}', space=vmem, size = 0x1000, scoped, tag = 'input window, operand 0, single buffered']
    #allocation4 [shape = 's32[1]{0}', space=sflag, size = 0x4, scoped, tag = 'scoped memory for tpu_custom_call.1']
    #allocation5 [shape = 's32[1]{0}', space=sflag, size = 0x4, scoped, tag = 'scoped memory for tpu_custom_call.1']
    #allocation6 [shape = 'u8[26624]{0}', space=vmem, size = 0x6800, scoped, tag = 'input window, operand 1, single buffered']
    #allocation7 [shape = 's32[1]{0}', space=sflag, size = 0x4, scoped, tag = 'scoped memory for tpu_custom_call.1']
    #allocation8 [shape = 'u8[512]{0}', space=vmem, size = 0x400, scoped, tag = 'output window, operand 0, single buffered']
    %11 = vsyncpa [#allocation4], 0
    %12 = vsyncpa [#allocation7], 0
    %13 = vsyncpa [#allocation5], 0
    // Predicated region
    $region2: #{tpu_custom_call.1} parent=1 // pred_check
      _
    $region3: #{tpu_custom_call.1} parent=1 // pred_check_branch
      %15 = sbr.rel (0) target = $region5
    $region4: #{tpu_custom_call.1} parent=1 // pred_region
      %s17 = ssub.s32 128, 128
      %18 = vsyncadd [#allocation4], %s17
      %s20 = sshll.u32 [#allocation3], 4
      %s21 = int_to_ptr.vmem [resolvable:$true] %s20
      %23 = dma.hbm_to_vmem [thread:$0]  %s0, 128, %s21, [#allocation4]
    $region5: #{tpu_custom_call.1} parent=1 // pred_fallthru
      _
    // Predicated region
    $region6: #{tpu_custom_call.1} parent=1 // pred_check
      _
    $region7: #{tpu_custom_call.1} parent=1 // pred_check_branch
      %25 = sbr.rel (0) target = $region9
    $region8: #{tpu_custom_call.1} parent=1 // pred_region
      %s27 = ssub.s32 832, 832
      %28 = vsyncadd [#allocation7], %s27
      %s29 = sshll.u32 [#allocation6], 4
      %s30 = int_to_ptr.vmem [resolvable:$true] %s29
      %35 = dma.hbm_to_vmem [thread:$0]  %s1, 832, %s30, [#allocation7], 64, 64, 4
    $region9: #{tpu_custom_call.1} parent=1 // pred_fallthru
      _
    // Predicated region
    $region10: #{tpu_custom_call.1} parent=1 // pred_check
      _
    $region11: #{tpu_custom_call.1} parent=1 // pred_check_branch
      %37 = sbr.rel (0) target = $region13
    $region12: #{tpu_custom_call.1} parent=1 // pred_region
      _
    $region13: #{tpu_custom_call.1} parent=1 // pred_fallthru
      _
    // Predicated region
    $region14: #{tpu_custom_call.1} parent=1 // pred_check
      _
    $region15: #{tpu_custom_call.1} parent=1 // pred_check_branch
      %39 = sbr.rel (0) target = $region17
    $region16: #{tpu_custom_call.1} parent=1 // pred_region
      _
    $region17: #{tpu_custom_call.1} parent=1 // pred_fallthru
      _
    // Predicated region
    $region18: #{tpu_custom_call.1} parent=1 // pred_check
      _
    $region19: #{tpu_custom_call.1} parent=1 // pred_check_branch
      %41 = sbr.rel (0) target = $region21
    $region20: #{tpu_custom_call.1} parent=1 // pred_region
      _
    $region21: #{tpu_custom_call.1} parent=1 // pred_fallthru
      _
    // Predicated region
    $region22: #{tpu_custom_call.1} parent=1 // pred_check
      _
    $region23: #{tpu_custom_call.1} parent=1 // pred_check_branch
      %43 = sbr.rel (0) target = $region25
    $region24: #{tpu_custom_call.1} parent=1 // pred_region
      %44 = dma.done [#allocation4], 128
    $region25: #{tpu_custom_call.1} parent=1 // pred_fallthru
      _
    // Predicated region
    $region26: #{tpu_custom_call.1} parent=1 // pred_check
      _
    $region27: #{tpu_custom_call.1} parent=1 // pred_check_branch
      %46 = sbr.rel (0) target = $region29
    $region28: #{tpu_custom_call.1} parent=1 // pred_region
      %47 = dma.done [#allocation7], 832
    $region29: #{tpu_custom_call.1} parent=1 // pred_fallthru
      _
    %v49 = vld [vmem:[#allocation3] sm:$0xff]
    %v50 = vpack.c.bf16 %v49, %v49
    %v51 = vld [vmem:[#allocation6] sm:$0xf]
    %v52 = vld [vmem:[#allocation6 + $0x4] sm:$0xf]
    %v53 = vld [vmem:[#allocation6 + $0x8] sm:$0xf]
    %v54 = vld [vmem:[#allocation6 + $0xc] sm:$0xf]
    %v55 = vld [vmem:[#allocation6 + $0x10] sm:$0xf]
    %v56 = vld [vmem:[#allocation6 + $0x14] sm:$0xf]
    %v57 = vld [vmem:[#allocation6 + $0x18] sm:$0xf]
    %v58 = vld [vmem:[#allocation6 + $0x1c] sm:$0xf]
    %v59 = vld [vmem:[#allocation6 + $0x20] sm:$0xf]
    %v60 = vld [vmem:[#allocation6 + $0x24] sm:$0xf]
    %v61 = vld [vmem:[#allocation6 + $0x28] sm:$0xf]
    %v62 = vld [vmem:[#allocation6 + $0x2c] sm:$0xf]
    %v63 = vld [vmem:[#allocation6 + $0x30] sm:$0x3]
    %v64 = vld [vmem:[%s2] sm:$0x1]
    %v66 = vlaneseq
    %v67 = vshrl.u32 %v66, 7
    %v68 = vsub.s32 0, %v67
    %v69 = vrot.slane %v64, %v68
    %v84 = vunpack.c.l.b16 %v51
    %v85 = vunpack.c.l.b16 %v52
    %v86 = vunpack.c.l.b16 %v53
    %v87 = vunpack.c.l.b16 %v54
    %v88 = vunpack.c.l.b16 %v55
    %v89 = vunpack.c.l.b16 %v56
    %v90 = vunpack.c.l.b16 %v57
    %v91 = vunpack.c.l.b16 %v58
    %v92 = vunpack.c.l.b16 %v59
    %v93 = vunpack.c.l.b16 %v60
    %v94 = vunpack.c.l.b16 %v61
    %v95 = vunpack.c.l.b16 %v62
    %v96 = vunpack.c.l.b16 %v63
    %v97 = vpack.c.b16 %v85, %v84
    %v98 = vpack.c.b16 %v87, %v86
    %v99 = vpack.c.b16 %v89, %v88
    %v100 = vpack.c.b16 %v91, %v90
    %v101 = vpack.c.b16 %v93, %v92
    %v102 = vpack.c.b16 %v95, %v94
    %v103 = vpack.c.b16 %v96, %v96
    %vm110 = vcmask 818176
    %v112 = vsel %vm110, %v50, 0
    %vm114 = vcmask 1041408
    %v116 = vsel %vm114, %v103, 0
    %118 = vmatprep.subr.bf16.mxu0 0
    %119 = vmatpush1.bf16.msra.mxu0 %v97
    %120 = vmatprep.subr.bf16.mxu0 0
    %121 = vmatpush1.bf16.msra.mxu0 %v98
    %122 = vmatprep.subr.bf16.mxu0 0
    %123 = vmatpush1.bf16.msra.mxu0 %v99
    %124 = vmatprep.subr.bf16.mxu0 0
    %125 = vmatpush1.bf16.msra.mxu0 %v100
    %126 = vmatprep.subr.bf16.mxu0 0
    %127 = vmatpush1.bf16.msra.mxu0 %v101
    %128 = vmatprep.subr.bf16.mxu0 0
    %129 = vmatpush1.bf16.msra.mxu0 %v102
    %130 = vmatprep.subr.bf16.mxu0 0
    %131 = vmatpush1.bf16.msra.mxu0 %v116
    %132 = vmatprep.subr.bf16.mxu0 0
    %133 = vmatpush1.bf16.msra.mxu0 0
    %134 = vmatprep.subr.bf16.mxu0 0
    %135 = vmatpush1.bf16.msra.mxu0 0
    %136 = vmatprep.subr.bf16.mxu0 0
    %137 = vmatpush1.bf16.msra.mxu0 0
    %138 = vmatprep.subr.bf16.mxu0 0
    %139 = vmatpush1.bf16.msra.mxu0 0
    %140 = vmatprep.subr.bf16.mxu0 0
    %141 = vmatpush1.bf16.msra.mxu0 0
    %142 = vmatprep.subr.bf16.mxu0 0
    %143 = vmatpush1.bf16.msra.mxu0 0
    %144 = vmatprep.subr.bf16.mxu0 0
    %145 = vmatpush1.bf16.msra.mxu0 0
    %146 = vmatprep.subr.bf16.mxu0 0
    %147 = vmatpush1.bf16.msra.mxu0 0
    %148 = vmatprep.subr.bf16.mxu0 0
    %149 = vmatpush1.bf16.msra.mxu0 0
    %150 = vmatprep.mubr.bf16.mxu0 0
    %151 = vmatmul.mubr.bf16.gmra.mrb[0].mxu0 %v112
    %v152 = vpop.f32.mrb[0].mxu0
    %v153 = vadd.f32 %v69, %v152
    %v154 = vpop.f32.mrb[0].mxu0
    %v155 = vpop.f32.mrb[0].mxu0
    %v156 = vpop.f32.mrb[0].mxu0
    %157 = vdwg.mxu0
    %v158 = vmax.f32 %v153, 0.0
    %v159 = vld [vmem:[%s3] sm:$0x1]
    %v161 = vlaneseq
    %v162 = vshrl.u32 %v161, 7
    %v163 = vsub.s32 0, %v162
    %v164 = vrot.slane %v159, %v163
    %v166 = vmul.f32 %v158, %v164
    %167 = vadd.xlane.f32.xlu0 %v166
    %v168 = vpop.xlane.xlu0 %167
    %s169 = sld [smem:[#allocation2]]
    %v170 = vstv %s169
    %v171 = vadd.f32 %v168, %v170
    %v172 = vsub.f32 0.0, %v171
    %v173 = vmul.f32 %v172, 1.442695
    %v174 = vpow.pop %v173
    %v175 = vadd.f32 %v174, 1.0
    %v176 = vrcp.pop %v175
    %v177 = vmul.f32 1.0, %v176
    %v179 = vlaneseq
    %v180 = vand.u32 %v179, 127
    %v181 = vlaneseq
    %v182 = vshrl.u32 %v181, 7
    %v183 = vsub.s32 %v180, %v182
    %v184 = vrot.slane %v177, %v183
    %vm186 = vcmask 57344
    %187 = vst.msk [vmem:[#allocation8] sm:$0x1] %vm186, %v184
    // Predicated region
    $region30: #{tpu_custom_call.1} parent=1 // pred_check
      _
    $region31: #{tpu_custom_call.1} parent=1 // pred_check_branch
      %189 = sbr.rel (0) target = $region33
    $region32: #{tpu_custom_call.1} parent=1 // pred_region
      %s191 = ssub.s32 16, 16
      %192 = vsyncadd [#allocation5], %s191
      %s194 = sshll.u32 [#allocation8], 4
      %s195 = int_to_ptr.vmem [resolvable:$true] %s194
      %197 = dma.vmem_to_hbm [thread:$0]  %s195, 16, %s5, [#allocation5]
    $region33: #{tpu_custom_call.1} parent=1 // pred_fallthru
      _
    // Predicated region
    $region34: #{tpu_custom_call.1} parent=1 // pred_check
      _
    $region35: #{tpu_custom_call.1} parent=1 // pred_check_branch
      %199 = sbr.rel (0) target = $region37
    $region36: #{tpu_custom_call.1} parent=1 // pred_region
      %200 = dma.done [#allocation5], 16
    $region37: #{tpu_custom_call.1} parent=1 // pred_fallthru
      _
    %201 = vsyncpa [#allocation4], 1
    %202 = vsyncpa [#allocation7], 1
    %203 = vsyncpa [#allocation5], 1

</llo_original>
